<compile_context>
chip_gen: v6e
topology: v6e:2x2x1
jax: 0.10.0
libtpu: 0.0.40
codegen_flags: <defaults>
</compile_context>

<pallas_src>
import math

import jax
import jax.numpy as jnp
from jax.experimental import pallas as pl
from jax.experimental.pallas import tpu as pltpu


def _mlp_kernel(x_ref, w1t_ref, b1_ref, w2_ref, b2_ref, o_ref):
    # x_ref:   [TB, Cin]  batch tile (sublanes) x features (lanes), dtype of x
    # w1t_ref: [Cin, H]   torch lin1.weight transposed; VMEM-resident across steps
    # b1_ref:  [1, H]     f32
    # w2_ref:  [1, H]     torch lin2.weight (out=1 row); f32
    # b2_ref:  [1]        SMEM scalar, f32
    # o_ref:   [TB, 1]
    # Layer 1 on the MXU in x's natural layout (no in-kernel transpose of x):
    #   h = x @ w1^T -> [TB, H], f32 accumulation.
    h = jnp.dot(x_ref[...], w1t_ref[...], preferred_element_type=jnp.float32)
    h = jnp.maximum(h + b1_ref[...], 0.0)                 # bias + ReLU in f32 (VPU)
    # Layer 2 (H -> 1): broadcast-multiply (VPU) + small cross-lane reduce (XLU);
    # avoids a second MXU matmul for the tiny 5x1 projection.
    y = jnp.sum(h * w2_ref[...], axis=-1, keepdims=True)  # [TB, 1]
    o_ref[...] = (y + b2_ref[0]).astype(o_ref.dtype)


def _pick_batch_tile(B, block_b):
    """Batch tile that divides B exactly (so no padding / ragged blocks), is a
    multiple of 128 when possible (multiple of 8 otherwise), and yields >= 2 grid
    steps for B >= 256 so both v7x TensorCores get work. Small / awkward batches
    fall back to a single full-array block (always legal)."""
    if B < 256:
        return B
    for quantum in (128, 8):
        if B % quantum == 0:
            max_tb = max(quantum, (min(block_b, B // 2) // quantum) * quantum)
            tb = max_tb
            while B % tb != 0:
                tb -= quantum
            return tb
    return B


def mlp_forward(x, w1, b1, w2, b2, *, block_b=2048):
    """relu(x @ w1.T + b1) @ w2.T + b2  ->  [B, 1] float32.

    x:  [B, Cin]  (f32, or bf16 if the caller already produces bf16 activations)
    w1: [H, Cin]  torch lin1.weight layout
    b1: [H]
    w2: [1, H]    torch lin2.weight layout
    b2: [1] or scalar

    block_b: batch tile upper bound. ~1-2K is a good default; v7x (3.2 TB/s HBM)
    likes 2048-4096, v5e already saturates around 512-1024.
    """
    B, Cin = x.shape
    H = w1.shape[0]

    # Pre-transpose the tiny first-layer weight once (40x5). If x arrives bf16,
    # only the weight is cast (kernel accumulates in f32 either way); x itself is
    # never rewritten by the wrapper -- it is the HBM-bound operand.
    w1t = jnp.asarray(w1, jnp.float32).T
    if x.dtype == jnp.bfloat16:
        w1t = w1t.astype(jnp.bfloat16)
    b1_row = jnp.asarray(b1, jnp.float32).reshape(1, H)
    w2_row = jnp.asarray(w2, jnp.float32).reshape(1, H)
    b2_s = jnp.asarray(b2, jnp.float32).reshape(1)

    tb = _pick_batch_tile(B, block_b)
    nb = B // tb if B % tb == 0 else 1  # tile picker guarantees tb | B or tb == B

    cost = pl.CostEstimate(
        flops=int(2 * B * Cin * H + 4 * B * H),
        transcendentals=0,
        bytes_accessed=int(x.dtype.itemsize * B * Cin + 4 * B
                           + w1t.dtype.itemsize * Cin * H + 4 * (2 * H + 1)),
    )

    out = pl.pallas_call(
        _mlp_kernel,
        out_shape=jax.ShapeDtypeStruct((B, 1), jnp.float32),
        grid=(nb,),
        in_specs=[
            pl.BlockSpec((tb, Cin), lambda i: (i, 0)),           # pipelined batch tile
            pl.BlockSpec((Cin, H), lambda i: (0, 0)),            # resident w1^T
            pl.BlockSpec((1, H), lambda i: (0, 0)),              # resident bias1
            pl.BlockSpec((1, H), lambda i: (0, 0)),              # resident weight2
            pl.BlockSpec(memory_space=pltpu.MemorySpace.SMEM),   # scalar bias2
        ],
        out_specs=pl.BlockSpec((tb, 1), lambda i: (i, 0)),
        compiler_params=pltpu.CompilerParams(
            dimension_semantics=("parallel",),                   # megacore sharding on v7x
        ),
        cost_estimate=cost,
    )(x, w1t, b1_row, w2_row, b2_s)
    return out


def init_params(key, num_features, hidden_channels, output_channels=1):
    """torch.nn.Linear default init semantics: U(-1/sqrt(fan_in), +1/sqrt(fan_in)).
    Layouts match torch: w1 [H, Cin] (lin1.weight), b1 [H], w2 [1, H] (lin2.weight), b2 [1]."""
    k1, k2, k3, k4 = jax.random.split(key, 4)
    bound1 = 1.0 / math.sqrt(num_features)
    w1 = jax.random.uniform(k1, (hidden_channels, num_features), jnp.float32, -bound1, bound1)
    b1 = jax.random.uniform(k2, (hidden_channels,), jnp.float32, -bound1, bound1)
    bound2 = 1.0 / math.sqrt(hidden_channels)
    w2 = jax.random.uniform(k3, (output_channels, hidden_channels), jnp.float32, -bound2, bound2)
    b2 = jax.random.uniform(k4, (output_channels,), jnp.float32, -bound2, bound2)
    return w1, b1, w2, b2


if __name__ == "__main__":
    key = jax.random.PRNGKey(0)
    kx, kp = jax.random.split(key)

    # "5 node, 40 channels" head: Cin=40 features, H=5 hidden. batch=256 gives a
    # 2-step parallel grid (tb=128) without any wrapper-side padding or casting.
    batch = 256
    num_features = 40
    hidden_channels = 5

    x = jax.random.normal(kx, (batch, num_features), dtype=jnp.float32)
    w1, b1, w2, b2 = init_params(kp, num_features, hidden_channels)

    # Pure-JAX reference (same semantics as the PyTorch forward).
    ref = jnp.maximum(x @ w1.T + b1[None, :], 0.0) @ w2.T + b2

    # f32 path (exact), 2 parallel grid steps.
    out = mlp_forward(x, w1, b1, w2, b2)
    jax.block_until_ready(out)
    assert out.shape == (batch, 1)
    assert jnp.allclose(out, ref, atol=1e-5, rtol=1e-5)

    # Ragged batch: single full-array block, no padding pass over x.
    out_r = mlp_forward(x[:200], w1, b1, w2, b2)
    jax.block_until_ready(out_r)
    assert out_r.shape == (200, 1)
    assert jnp.allclose(out_r, ref[:200], atol=1e-5, rtol=1e-5)

    # bf16 path only when x is born bf16 upstream (only the tiny w1 gets cast).
    x_bf16 = x.astype(jnp.bfloat16)
    out_bf = mlp_forward(x_bf16, w1, b1, w2, b2)
    jax.block_until_ready(out_bf)
    w1_bf = w1.astype(jnp.bfloat16).astype(jnp.float32)
    ref_bf = (jnp.maximum(x_bf16.astype(jnp.float32) @ w1_bf.T + b1[None, :], 0.0)
              @ w2.T + b2)
    assert jnp.allclose(out_bf, ref_bf, atol=1e-3, rtol=1e-3)

    print("KERNEL_OK")
</pallas_src>

<mosaic_0001>
module attributes {stable_mosaic.version = 11 : i64} {
  func.func @_mlp_kernel(%arg0: i32, %arg1: memref<128x40xf32, #tpu.memory_space<vmem>>, %arg2: memref<40x5xf32, #tpu.memory_space<vmem>>, %arg3: memref<1x5xf32, #tpu.memory_space<vmem>>, %arg4: memref<1x5xf32, #tpu.memory_space<vmem>>, %arg5: memref<1xf32, #tpu.memory_space<smem>>, %arg6: memref<128x1xf32, #tpu.memory_space<vmem>>) attributes {dimension_semantics = [#tpu.dimension_semantics<parallel>], iteration_bounds = array<i64: 2>, scalar_prefetch = 0 : i64, scratch_operands = 0 : i64, tpu.core_type = #tpu.core_type<tc>, window_params = [{transform_indices = @transform_0, window_bounds = array<i64: 128, 40>}, {pipeline_mode = #tpu.pipeline_mode<synchronous>, transform_indices = @transform_1, window_bounds = array<i64: 40, 5>}, {pipeline_mode = #tpu.pipeline_mode<synchronous>, transform_indices = @transform_2, window_bounds = array<i64: 1, 5>}, {pipeline_mode = #tpu.pipeline_mode<synchronous>, transform_indices = @transform_3, window_bounds = array<i64: 1, 5>}, {transform_indices = @transform_4, window_bounds = array<i64: 1>}, {transform_indices = @transform_5, window_bounds = array<i64: 128, 1>}]} {
    %c0 = arith.constant 0 : index
    %c0_0 = arith.constant 0 : index
    %0 = vector.load %arg1[%c0, %c0_0] : memref<128x40xf32, #tpu.memory_space<vmem>>, vector<128x40xf32>
    %c0_1 = arith.constant 0 : index
    %c0_2 = arith.constant 0 : index
    %1 = vector.load %arg2[%c0_1, %c0_2] : memref<40x5xf32, #tpu.memory_space<vmem>>, vector<40x5xf32>
    %cst = arith.constant dense<0.000000e+00> : vector<128x5xf32>
    %2 = tpu.matmul %0, %1, %cst {dimension_numbers = #tpu.dot_dimension_numbers<[1], [0], [0], [1], [0, 0, 1, 1], [], []>} : vector<128x40xf32>, vector<40x5xf32>, vector<128x5xf32> -> vector<128x5xf32>
    %c0_3 = arith.constant 0 : index
    %c0_4 = arith.constant 0 : index
    %3 = vector.load %arg3[%c0_3, %c0_4] : memref<1x5xf32, #tpu.memory_space<vmem>>, vector<1x5xf32>
    %4 = vector.broadcast %3 : vector<1x5xf32> to vector<128x5xf32>
    %5 = arith.addf %2, %4 : vector<128x5xf32>
    %cst_5 = arith.constant 0.000000e+00 : f32
    %6 = vector.broadcast %cst_5 : f32 to vector<128x5xf32>
    %7 = arith.maximumf %5, %6 : vector<128x5xf32>
    %c0_6 = arith.constant 0 : index
    %c0_7 = arith.constant 0 : index
    %8 = vector.load %arg4[%c0_6, %c0_7] : memref<1x5xf32, #tpu.memory_space<vmem>>, vector<1x5xf32>
    %9 = vector.broadcast %8 : vector<1x5xf32> to vector<128x5xf32>
    %10 = arith.mulf %7, %9 : vector<128x5xf32>
    %cst_8 = arith.constant dense<0.000000e+00> : vector<128xf32>
    %11 = vector.multi_reduction <add>, %10, %cst_8 [1] : vector<128x5xf32> to vector<128xf32>
    %12 = vector.shape_cast %11 : vector<128xf32> to vector<128x1xf32>
    %c0_9 = arith.constant 0 : index
    %13 = memref.load %arg5[%c0_9] : memref<1xf32, #tpu.memory_space<smem>>
    %14 = vector.broadcast %13 : f32 to vector<128x1xf32>
    %15 = arith.addf %12, %14 : vector<128x1xf32>
    %c0_10 = arith.constant 0 : index
    %c0_11 = arith.constant 0 : index
    %16 = vector.load %arg6[%c0_10, %c0_11] : memref<128x1xf32, #tpu.memory_space<vmem>>, vector<128x1xf32>
    tpu.vector_store %arg6[%c0_10, %c0_11], %15 {strides = array<i32>} : memref<128x1xf32, #tpu.memory_space<vmem>>, vector<128x1xf32>,
    return
  }
  func.func @transform_0(%arg0: i32) -> (i32, i32) {
    %c0_i32 = arith.constant 0 : i32
    %c0_i32_0 = arith.constant 0 : i32
    return %arg0, %c0_i32 : i32, i32
  }
  func.func @transform_1(%arg0: i32) -> (i32, i32) {
    %c0_i32 = arith.constant 0 : i32
    %c0_i32_0 = arith.constant 0 : i32
    %c0_i32_1 = arith.constant 0 : i32
    return %c0_i32, %c0_i32_0 : i32, i32
  }
  func.func @transform_2(%arg0: i32) -> (i32, i32) {
    %c0_i32 = arith.constant 0 : i32
    %c0_i32_0 = arith.constant 0 : i32
    %c0_i32_1 = arith.constant 0 : i32
    return %c0_i32, %c0_i32_0 : i32, i32
  }
  func.func @transform_3(%arg0: i32) -> (i32, i32) {
    %c0_i32 = arith.constant 0 : i32
    %c0_i32_0 = arith.constant 0 : i32
    %c0_i32_1 = arith.constant 0 : i32
    return %c0_i32, %c0_i32_0 : i32, i32
  }
  func.func @transform_4(%arg0: i32) -> i32 {
    %c0_i32 = arith.constant 0 : i32
    %c0_i32_0 = arith.constant 0 : i32
    return %c0_i32 : i32
  }
  func.func @transform_5(%arg0: i32) -> (i32, i32) {
    %c0_i32 = arith.constant 0 : i32
    %c0_i32_0 = arith.constant 0 : i32
    return %arg0, %c0_i32 : i32, i32
  }
}

</mosaic_0001>

<llo_original>
// kernel: tpu_custom_call.1
$region0: #{tpu_custom_call.1}
  #allocation0 [shape = 'u32[]', space=smem, size = 0x4, offset = 0x4, fixed_abs, tag = 'smem constant byte address 0x4 - core index']
  #allocation1 [shape = 'u32[144,128]{1,0:T(1,128)}', space=vmem, size = 0x12000, scoped, tag = 'internal scratch']
  #allocation2 [shape = 'f32[1]{0:T(128)S(6)}', space=smem, size = 0x200, scoped, tag = 'scoped memory for tpu_custom_call.1']
  %s0 = inlined_call_operand.vmem [shape: f32[256,40], index: 0, kind: input, shape index: {}]
  %s1 = inlined_call_operand.vmem [shape: f32[40,5], index: 1, kind: input, shape index: {}]
  %s2 = inlined_call_operand.vmem [shape: f32[1,5], index: 2, kind: input, shape index: {}]
  %s3 = inlined_call_operand.vmem [shape: f32[1,5], index: 3, kind: input, shape index: {}]
  %s4 = inlined_call_operand.<no memory space> [shape: f32[1], index: 4, kind: input, shape index: {}]
  %s5 = inlined_call_operand.vmem [shape: f32[256,1], index: 5, kind: output, shape index: {}]
  %s6 = sld [smem:[#allocation0]]
  $region53: #{tpu_custom_call.1} parent=0
    _
  %s8 = ssub.s32 1, %s6
  %s9 = scalar_select 0, %s8, %s6
  %10 = sst [smem:[#allocation2]] %s4
  loop: start=0, step=1, limit=4
  $region2: #{tpu_custom_call.1} parent=0 // loop_pre_header
    _
  $region3: #{tpu_custom_call.1} parent=0 // loop_header
    %s12 = sphi 0, %s16
    %p13 = scmp.ge.s32.totalorder %s12, 4
    %s22 = sphi 0, %s24
    %s25 = sphi 0, %s22
    %s26 = sphi 0, %s25
    %s42 = sphi 0, %s26
    %s46 = sphi 0, %s46
    %s48 = sphi 0, %s46
    %s49 = sphi 0, %s48
    %s63 = sphi 0, %s49
    %s67 = sphi 0, %s67
    %s69 = sphi 0, %s67
    %s70 = sphi 0, %s69
    %s84 = sphi 0, %s70
    %s88 = sphi 0, %s88
    %s90 = sphi 0, %s88
    %s91 = sphi 0, %s90
    %s105 = sphi 0, %s91
    %s109 = sphi 0, %s109
    %s111 = sphi 0, %s109
    %s112 = sphi 0, %s111
    %s126 = sphi 0, %s112
    %s132 = sphi 0, %s134
    %s135 = sphi 0, %s132
    %s136 = sphi 0, %s135
    %s152 = sphi 0, %s136
  $region4: #{tpu_custom_call.1} parent=0 // loop_header_branch
    %15 = sbr.rel (%p13) target = $region8
  $region5: #{tpu_custom_call.1} parent=0 // loop_body
    %s17 = ssub.s32 %s12, 1
    %s18 = ssub.s32 %s12, 2
    %s19 = sadd.s32 %s12, 1
    %s20 = ssub.s32 %s12, %s19
    %p21 = scmp.eq.s32.totalorder %s20, 0
    %s23 = sadd.s32 %s22, 1
    %s24 = scalar_select %p21, %s22, %s23
    %p27 = pneg %p21
    %p28 = scmp.eq.s32.totalorder %s12, 1
    %p29 = por %p27, %p28
    %p30 = scmp.ne.s32.totalorder %s22, %s25
    %p31 = scmp.eq.s32.totalorder %s12, 0
    %p32 = por %p30, %p31
    %p33 = scmp.ne.s32.totalorder %s22, %s25
    %p34 = scmp.eq.s32.totalorder %s17, 1
    %p35 = por %p33, %p34
    %p36 = scmp.ne.s32.totalorder %s25, %s26
    %p37 = scmp.eq.s32.totalorder %s17, 0
    %p38 = por %p36, %p37
    %p39 = scmp.ne.s32.totalorder %s25, %s26
    %p40 = scmp.eq.s32.totalorder %s18, 1
    %p41 = por %p39, %p40
    %p43 = scmp.ne.s32.totalorder %s26, %s42
    %p44 = scmp.eq.s32.totalorder %s18, 0
    %p45 = por %p43, %p44
    %s47 = sadd.s32 %s46, 1
    %p50 = scmp.eq.s32.totalorder %s12, 1
    %p51 = scmp.ne.s32.totalorder %s46, %s48
    %p52 = scmp.eq.s32.totalorder %s12, 0
    %p53 = por %p51, %p52
    %p54 = scmp.ne.s32.totalorder %s46, %s48
    %p55 = scmp.eq.s32.totalorder %s17, 1
    %p56 = por %p54, %p55
    %p57 = scmp.ne.s32.totalorder %s48, %s49
    %p58 = scmp.eq.s32.totalorder %s17, 0
    %p59 = por %p57, %p58
    %p60 = scmp.ne.s32.totalorder %s48, %s49
    %p61 = scmp.eq.s32.totalorder %s18, 1
    %p62 = por %p60, %p61
    %p64 = scmp.ne.s32.totalorder %s49, %s63
    %p65 = scmp.eq.s32.totalorder %s18, 0
    %p66 = por %p64, %p65
    %s68 = sadd.s32 %s67, 1
    %p71 = scmp.eq.s32.totalorder %s12, 1
    %p72 = scmp.ne.s32.totalorder %s67, %s69
    %p73 = scmp.eq.s32.totalorder %s12, 0
    %p74 = por %p72, %p73
    %p75 = scmp.ne.s32.totalorder %s67, %s69
    %p76 = scmp.eq.s32.totalorder %s17, 1
    %p77 = por %p75, %p76
    %p78 = scmp.ne.s32.totalorder %s69, %s70
    %p79 = scmp.eq.s32.totalorder %s17, 0
    %p80 = por %p78, %p79
    %p81 = scmp.ne.s32.totalorder %s69, %s70
    %p82 = scmp.eq.s32.totalorder %s18, 1
    %p83 = por %p81, %p82
    %p85 = scmp.ne.s32.totalorder %s70, %s84
    %p86 = scmp.eq.s32.totalorder %s18, 0
    %p87 = por %p85, %p86
    %s89 = sadd.s32 %s88, 1
    %p92 = scmp.eq.s32.totalorder %s12, 1
    %p93 = scmp.ne.s32.totalorder %s88, %s90
    %p94 = scmp.eq.s32.totalorder %s12, 0
    %p95 = por %p93, %p94
    %p96 = scmp.ne.s32.totalorder %s88, %s90
    %p97 = scmp.eq.s32.totalorder %s17, 1
    %p98 = por %p96, %p97
    %p99 = scmp.ne.s32.totalorder %s90, %s91
    %p100 = scmp.eq.s32.totalorder %s17, 0
    %p101 = por %p99, %p100
    %p102 = scmp.ne.s32.totalorder %s90, %s91
    %p103 = scmp.eq.s32.totalorder %s18, 1
    %p104 = por %p102, %p103
    %p106 = scmp.ne.s32.totalorder %s91, %s105
    %p107 = scmp.eq.s32.totalorder %s18, 0
    %p108 = por %p106, %p107
    %s110 = sadd.s32 %s109, 1
    %p113 = scmp.eq.s32.totalorder %s12, 1
    %p114 = scmp.ne.s32.totalorder %s109, %s111
    %p115 = scmp.eq.s32.totalorder %s12, 0
    %p116 = por %p114, %p115
    %p117 = scmp.ne.s32.totalorder %s109, %s111
    %p118 = scmp.eq.s32.totalorder %s17, 1
    %p119 = por %p117, %p118
    %p120 = scmp.ne.s32.totalorder %s111, %s112
    %p121 = scmp.eq.s32.totalorder %s17, 0
    %p122 = por %p120, %p121
    %p123 = scmp.ne.s32.totalorder %s111, %s112
    %p124 = scmp.eq.s32.totalorder %s18, 1
    %p125 = por %p123, %p124
    %p127 = scmp.ne.s32.totalorder %s112, %s126
    %p128 = scmp.eq.s32.totalorder %s18, 0
    %p129 = por %p127, %p128
    %s130 = ssub.s32 %s12, %s19
    %p131 = scmp.eq.s32.totalorder %s130, 0
    %s133 = sadd.s32 %s132, 1
    %s134 = scalar_select %p131, %s132, %s133
    %p137 = pneg %p131
    %p138 = scmp.eq.s32.totalorder %s12, 1
    %p139 = por %p137, %p138
    %p140 = scmp.ne.s32.totalorder %s132, %s135
    %p141 = scmp.eq.s32.totalorder %s12, 0
    %p142 = por %p140, %p141
    %p143 = scmp.ne.s32.totalorder %s132, %s135
    %p144 = scmp.eq.s32.totalorder %s17, 1
    %p145 = por %p143, %p144
    %p146 = scmp.ne.s32.totalorder %s135, %s136
    %p147 = scmp.eq.s32.totalorder %s17, 0
    %p148 = por %p146, %p147
    %p149 = scmp.ne.s32.totalorder %s135, %s136
    %p150 = scmp.eq.s32.totalorder %s18, 1
    %p151 = por %p149, %p150
    %p153 = scmp.ne.s32.totalorder %s136, %s152
    %p154 = scmp.eq.s32.totalorder %s18, 0
    %p155 = por %p153, %p154
    %p156 = scmp.le.s32.totalorder 1, %s12
    %p157 = scmp.lt.s32.totalorder %s12, 3
    %p158 = pnand %p156, %p157
    %p159 = pneg %p158
    // Predicated region
    $region9: #{tpu_custom_call.1} parent=5 // pred_check
      _
    $region10: #{tpu_custom_call.1} parent=5 // pred_check_branch
      %161 = sbr.rel (%p158) target = $region12
    $region11: #{tpu_custom_call.1} parent=5 // pred_region
      %s162 = ssub.s32 %s12, 1
      // Predicated region
      $region13: #{tpu_custom_call.1} parent=11 // pred_check
        %p163 = pneg %p59
      $region14: #{tpu_custom_call.1} parent=11 // pred_check_branch
        %165 = sbr.rel (%p163) target = $region16
      $region15: #{tpu_custom_call.1} parent=11 // pred_region
        _
      $region16: #{tpu_custom_call.1} parent=11 // pred_fallthru
        _
      // Predicated region
      $region17: #{tpu_custom_call.1} parent=11 // pred_check
        %p166 = pneg %p80
      $region18: #{tpu_custom_call.1} parent=11 // pred_check_branch
        %168 = sbr.rel (%p166) target = $region20
      $region19: #{tpu_custom_call.1} parent=11 // pred_region
        _
      $region20: #{tpu_custom_call.1} parent=11 // pred_fallthru
        _
      // Predicated region
      $region21: #{tpu_custom_call.1} parent=11 // pred_check
        %p169 = pneg %p101
      $region22: #{tpu_custom_call.1} parent=11 // pred_check_branch
        %171 = sbr.rel (%p169) target = $region24
      $region23: #{tpu_custom_call.1} parent=11 // pred_region
        _
      $region24: #{tpu_custom_call.1} parent=11 // pred_fallthru
        _
      // Predicated region
      $region25: #{tpu_custom_call.1} parent=11 // pred_check
        %p172 = pneg %p122
      $region26: #{tpu_custom_call.1} parent=11 // pred_check_branch
        %174 = sbr.rel (%p172) target = $region28
      $region27: #{tpu_custom_call.1} parent=11 // pred_region
        _
      $region28: #{tpu_custom_call.1} parent=11 // pred_fallthru
        _
    $region12: #{tpu_custom_call.1} parent=5 // pred_fallthru
      _
    %p175 = scmp.lt.s32.totalorder %s12, 2
    // Predicated region
    $region29: #{tpu_custom_call.1} parent=5 // pred_check
      %p176 = pneg %p175
    $region30: #{tpu_custom_call.1} parent=5 // pred_check_branch
      %178 = sbr.rel (%p176) target = $region32
    $region31: #{tpu_custom_call.1} parent=5 // pred_region
      // Predicated region
      $region33: #{tpu_custom_call.1} parent=31 // pred_check
        %p179 = pneg %p32
      $region34: #{tpu_custom_call.1} parent=31 // pred_check_branch
        %181 = sbr.rel (%p179) target = $region36
      $region35: #{tpu_custom_call.1} parent=31 // pred_region
        %s182 = smul.u32 16, %s12
        %p183 = scmp.lt.s32.totalorder %s182, 31
        %s184 = scalar_select %p183, %s182, 31
        %s185 = smul.addr %s184, 8
        %s186 = scalar_lea.vmem %s0, %s185
        %s187 = smul.u32 16, %s12
      $region36: #{tpu_custom_call.1} parent=31 // pred_fallthru
        _
    $region32: #{tpu_custom_call.1} parent=5 // pred_fallthru
      _
    %p188 = scmp.le.s32.totalorder 1, %s12
    %p189 = scmp.lt.s32.totalorder %s12, 3
    %p190 = pnand %p188, %p189
    %p191 = pneg %p190
    // Predicated region
    $region37: #{tpu_custom_call.1} parent=5 // pred_check
      _
    $region38: #{tpu_custom_call.1} parent=5 // pred_check_branch
      %193 = sbr.rel (%p190) target = $region40
    $region39: #{tpu_custom_call.1} parent=5 // pred_region
      %s194 = ssub.s32 %s12, 1
      %s195 = smul.u32 16, %s17
      %p196 = scmp.lt.s32.totalorder %s195, 31
      %s197 = scalar_select %p196, %s195, 31
      %s198 = smul.addr %s197, 8
      %s199 = scalar_lea.vmem %s0, %s198
      %p200 = pneg %p38
      %p201 = pneg %p35
      %p202 = pneg %p59
      %p203 = pneg %p56
      %p204 = pneg %p80
      %p205 = pneg %p77
      %p206 = pneg %p101
      %p207 = pneg %p98
      %p208 = pneg %p122
      %p209 = pneg %p119
      %p210 = pneg %p148
      %p211 = pneg %p145
      %s212 = smul.u32 16, %s17
      %p213 = scmp.lt.s32.totalorder %s212, 31
      %s214 = scalar_select %p213, %s212, 31
      %s215 = smul.addr %s214, 8
      %s216 = scalar_lea.vmem %s5, %s215
      %s217 = smul.u32 16, %s17
      %p218 = scmp.lt.s32.totalorder %s217, 31
      %s219 = scalar_select %p218, %s217, 31
      %s220 = smul.addr %s219, 8
      %s221 = scalar_lea.vmem %s0, %s220
      %s222 = smul.u32 16, %s17
      %s223 = smul.u32 16, %s17
      %p224 = scmp.lt.s32.totalorder %s223, 31
      %s225 = scalar_select %p224, %s223, 31
      %s226 = smul.addr %s225, 8
      %s227 = scalar_lea.vmem %s5, %s226
      %s228 = smul.u32 16, %s17
      %v229 = vld [vmem:[%s221] sm:$0xff]
      %v230 = vld [vmem:[%s221 + $0x8] sm:$0xff]
      %v231 = vld [vmem:[%s221 + $0x10] sm:$0xff]
      %v232 = vld [vmem:[%s221 + $0x18] sm:$0xff]
      %v233 = vld [vmem:[%s221 + $0x20] sm:$0xff]
      %v234 = vld [vmem:[%s221 + $0x28] sm:$0xff]
      %v235 = vld [vmem:[%s221 + $0x30] sm:$0xff]
      %v236 = vld [vmem:[%s221 + $0x38] sm:$0xff]
      %v237 = vld [vmem:[%s221 + $0x40] sm:$0xff]
      %v238 = vld [vmem:[%s221 + $0x48] sm:$0xff]
      %v239 = vld [vmem:[%s221 + $0x50] sm:$0xff]
      %v240 = vld [vmem:[%s221 + $0x58] sm:$0xff]
      %v241 = vld [vmem:[%s221 + $0x60] sm:$0xff]
      %v242 = vld [vmem:[%s221 + $0x68] sm:$0xff]
      %v243 = vld [vmem:[%s221 + $0x70] sm:$0xff]
      %v244 = vld [vmem:[%s221 + $0x78] sm:$0xff]
      %v245 = vld [vmem:[%s1] sm:$0xff]
      %v246 = vld [vmem:[%s1 + $0x8] sm:$0xff]
      %v247 = vld [vmem:[%s1 + $0x10] sm:$0xff]
      %v248 = vld [vmem:[%s1 + $0x18] sm:$0xff]
      %v249 = vld [vmem:[%s1 + $0x20] sm:$0xff]
      %v250 = vld [vmem:[%s2] sm:$0x1]
      %v252 = vlaneseq
      %v253 = vshrl.u32 %v252, 7
      %v254 = vsub.s32 0, %v253
      %v255 = vrot.slane %v250, %v254
      %vm257 = vcmask 326656
      %v259 = vsel %vm257, %v229, 0
      %v262 = vsel %vm257, %v230, 0
      %v265 = vsel %vm257, %v231, 0
      %v268 = vsel %vm257, %v232, 0
      %v271 = vsel %vm257, %v233, 0
      %v274 = vsel %vm257, %v234, 0
      %v277 = vsel %vm257, %v235, 0
      %v280 = vsel %vm257, %v236, 0
      %v283 = vsel %vm257, %v237, 0
      %v286 = vsel %vm257, %v238, 0
      %v289 = vsel %vm257, %v239, 0
      %v292 = vsel %vm257, %v240, 0
      %v295 = vsel %vm257, %v241, 0
      %v298 = vsel %vm257, %v242, 0
      %v301 = vsel %vm257, %v243, 0
      %v304 = vsel %vm257, %v244, 0
      %306 = vmatprep.subr.mxu0 0.0
      %307 = vmatpush1.msra.mxu0 0.0
      %308 = vmatprep.subr.mxu0 0.0
      %309 = vmatpush1.msra.mxu0 0.0
      %310 = vmatprep.subr.mxu0 0.0
      %311 = vmatpush1.msra.mxu0 0.0
      %312 = vmatprep.subr.mxu0 0.0
      %313 = vmatpush1.msra.mxu0 0.0
      %314 = vmatprep.subr.mxu0 0.0
      %315 = vmatpush1.msra.mxu0 0.0
      %316 = vmatprep.subr.mxu0 0.0
      %317 = vmatpush1.msra.mxu0 0.0
      %318 = vmatprep.subr.mxu0 0.0
      %319 = vmatpush1.msra.mxu0 0.0
      %320 = vmatprep.subr.mxu0 0.0
      %321 = vmatpush1.msra.mxu0 0.0
      %322 = vmatprep.subr.mxu0 0.0
      %323 = vmatpush1.msra.mxu0 0.0
      %324 = vmatprep.subr.mxu0 0.0
      %325 = vmatpush1.msra.mxu0 0.0
      %326 = vmatprep.subr.mxu0 0.0
      %327 = vmatpush1.msra.mxu0 0.0
      %328 = vmatprep.subr.mxu0 0.0
      %329 = vmatpush1.msra.mxu0 %v249
      %330 = vmatprep.subr.mxu0 0.0
      %331 = vmatpush1.msra.mxu0 %v248
      %332 = vmatprep.subr.mxu0 0.0
      %333 = vmatpush1.msra.mxu0 %v247
      %334 = vmatprep.subr.mxu0 0.0
      %335 = vmatpush1.msra.mxu0 %v246
      %336 = vmatprep.subr.mxu0 0.0
      %337 = vmatpush1.msra.mxu0 %v245
      %338 = vmatprep.subr.mxu0 0.0
      %339 = vmatpush2.msra.mxu0 0.0
      %340 = vmatprep.subr.mxu0 0.0
      %341 = vmatpush2.msra.mxu0 0.0
      %342 = vmatprep.subr.mxu0 0.0
      %343 = vmatpush2.msra.mxu0 0.0
      %344 = vmatprep.subr.mxu0 0.0
      %345 = vmatpush2.msra.mxu0 0.0
      %346 = vmatprep.subr.mxu0 0.0
      %347 = vmatpush2.msra.mxu0 0.0
      %348 = vmatprep.subr.mxu0 0.0
      %349 = vmatpush2.msra.mxu0 0.0
      %350 = vmatprep.subr.mxu0 0.0
      %351 = vmatpush2.msra.mxu0 0.0
      %352 = vmatprep.subr.mxu0 0.0
      %353 = vmatpush2.msra.mxu0 0.0
      %354 = vmatprep.subr.mxu0 0.0
      %355 = vmatpush2.msra.mxu0 0.0
      %356 = vmatprep.subr.mxu0 0.0
      %357 = vmatpush2.msra.mxu0 0.0
      %358 = vmatprep.subr.mxu0 0.0
      %359 = vmatpush2.msra.mxu0 0.0
      %360 = vmatprep.subr.mxu0 0.0
      %361 = vmatpush2.msra.mxu0 0.0
      %362 = vmatprep.subr.mxu0 0.0
      %363 = vmatpush2.msra.mxu0 0.0
      %364 = vmatprep.subr.mxu0 0.0
      %365 = vmatpush2.msra.mxu0 0.0
      %366 = vmatprep.subr.mxu0 0.0
      %367 = vmatpush2.msra.mxu0 0.0
      %368 = vmatprep.subr.mxu0 0.0
      %369 = vmatpush2.msra.mxu0 0.0
      %370 = vmatprep.mubr.f32.mxu0 0.0
      %371 = vmatmul.mubr.f32.gmra.mxu0 %v259
      %v372 = vpop.f32.mrf.mxu0
      %v373 = vadd.f32 %v255, %v372
      %v374 = vpop.f32.mrf.mxu0
      %375 = vmatprep.mubr.f32.mxu0 0.0
      %376 = vmatmul.mubr.f32.gmra.mxu0 %v262
      %v377 = vpop.f32.mrf.mxu0
      %v378 = vadd.f32 %v255, %v377
      %v379 = vpop.f32.mrf.mxu0
      %380 = vmatprep.mubr.f32.mxu0 0.0
      %381 = vmatmul.mubr.f32.gmra.mxu0 %v265
      %v382 = vpop.f32.mrf.mxu0
      %v383 = vadd.f32 %v255, %v382
      %v384 = vpop.f32.mrf.mxu0
      %385 = vmatprep.mubr.f32.mxu0 0.0
      %386 = vmatmul.mubr.f32.gmra.mxu0 %v268
      %v387 = vpop.f32.mrf.mxu0
      %v388 = vadd.f32 %v255, %v387
      %v389 = vpop.f32.mrf.mxu0
      %390 = vmatprep.mubr.f32.mxu0 0.0
      %391 = vmatmul.mubr.f32.gmra.mxu0 %v271
      %v392 = vpop.f32.mrf.mxu0
      %v393 = vadd.f32 %v255, %v392
      %v394 = vpop.f32.mrf.mxu0
      %395 = vmatprep.mubr.f32.mxu0 0.0
      %396 = vmatmul.mubr.f32.gmra.mxu0 %v274
      %v397 = vpop.f32.mrf.mxu0
      %v398 = vadd.f32 %v255, %v397
      %v399 = vpop.f32.mrf.mxu0
      %400 = vmatprep.mubr.f32.mxu0 0.0
      %401 = vmatmul.mubr.f32.gmra.mxu0 %v277
      %v402 = vpop.f32.mrf.mxu0
      %v403 = vadd.f32 %v255, %v402
      %v404 = vpop.f32.mrf.mxu0
      %405 = vmatprep.mubr.f32.mxu0 0.0
      %406 = vmatmul.mubr.f32.gmra.mxu0 %v280
      %v407 = vpop.f32.mrf.mxu0
      %v408 = vadd.f32 %v255, %v407
      %v409 = vpop.f32.mrf.mxu0
      %410 = vmatprep.mubr.f32.mxu0 0.0
      %411 = vmatmul.mubr.f32.gmra.mxu0 %v283
      %v412 = vpop.f32.mrf.mxu0
      %v413 = vadd.f32 %v255, %v412
      %v414 = vpop.f32.mrf.mxu0
      %415 = vmatprep.mubr.f32.mxu0 0.0
      %416 = vmatmul.mubr.f32.gmra.mxu0 %v286
      %v417 = vpop.f32.mrf.mxu0
      %v418 = vadd.f32 %v255, %v417
      %v419 = vpop.f32.mrf.mxu0
      %420 = vmatprep.mubr.f32.mxu0 0.0
      %421 = vmatmul.mubr.f32.gmra.mxu0 %v289
      %v422 = vpop.f32.mrf.mxu0
      %v423 = vadd.f32 %v255, %v422
      %v424 = vpop.f32.mrf.mxu0
      %425 = vmatprep.mubr.f32.mxu0 0.0
      %426 = vmatmul.mubr.f32.gmra.mxu0 %v292
      %v427 = vpop.f32.mrf.mxu0
      %v428 = vadd.f32 %v255, %v427
      %v429 = vpop.f32.mrf.mxu0
      %430 = vmatprep.mubr.f32.mxu0 0.0
      %431 = vmatmul.mubr.f32.gmra.mxu0 %v295
      %v432 = vpop.f32.mrf.mxu0
      %v433 = vadd.f32 %v255, %v432
      %v434 = vpop.f32.mrf.mxu0
      %435 = vmatprep.mubr.f32.mxu0 0.0
      %436 = vmatmul.mubr.f32.gmra.mxu0 %v298
      %v437 = vpop.f32.mrf.mxu0
      %v438 = vadd.f32 %v255, %v437
      %v439 = vpop.f32.mrf.mxu0
      %440 = vmatprep.mubr.f32.mxu0 0.0
      %441 = vmatmul.mubr.f32.gmra.mxu0 %v301
      %v442 = vpop.f32.mrf.mxu0
      %v443 = vadd.f32 %v255, %v442
      %v444 = vpop.f32.mrf.mxu0
      %445 = vmatprep.mubr.f32.mxu0 0.0
      %446 = vmatmul.mubr.f32.gmra.mxu0 %v304
      %v447 = vpop.f32.mrf.mxu0
      %v448 = vadd.f32 %v255, %v447
      %v449 = vpop.f32.mrf.mxu0
      %450 = vdwg.mxu0
      %v451 = vmax.f32 %v373, 0.0
      %v452 = vmax.f32 %v378, 0.0
      %v453 = vmax.f32 %v383, 0.0
      %v454 = vmax.f32 %v388, 0.0
      %v455 = vmax.f32 %v393, 0.0
      %v456 = vmax.f32 %v398, 0.0
      %v457 = vmax.f32 %v403, 0.0
      %v458 = vmax.f32 %v408, 0.0
      %v459 = vmax.f32 %v413, 0.0
      %v460 = vmax.f32 %v418, 0.0
      %v461 = vmax.f32 %v423, 0.0
      %v462 = vmax.f32 %v428, 0.0
      %v463 = vmax.f32 %v433, 0.0
      %v464 = vmax.f32 %v438, 0.0
      %v465 = vmax.f32 %v443, 0.0
      %v466 = vmax.f32 %v448, 0.0
      %v467 = vld [vmem:[%s3] sm:$0x1]
      %v469 = vlaneseq
      %v470 = vshrl.u32 %v469, 7
      %v471 = vsub.s32 0, %v470
      %v472 = vrot.slane %v467, %v471
      %v474 = vmul.f32 %v451, %v472
      %v475 = vmul.f32 %v452, %v472
      %v476 = vmul.f32 %v453, %v472
      %v477 = vmul.f32 %v454, %v472
      %v478 = vmul.f32 %v455, %v472
      %v479 = vmul.f32 %v456, %v472
      %v480 = vmul.f32 %v457, %v472
      %v481 = vmul.f32 %v458, %v472
      %v482 = vmul.f32 %v459, %v472
      %v483 = vmul.f32 %v460, %v472
      %v484 = vmul.f32 %v461, %v472
      %v485 = vmul.f32 %v462, %v472
      %v486 = vmul.f32 %v463, %v472
      %v487 = vmul.f32 %v464, %v472
      %v488 = vmul.f32 %v465, %v472
      %v489 = vmul.f32 %v466, %v472
      %vm490 = vcmask 39936
      %v491 = vsel %vm490, %v474, 0.0
      %492 = vadd.xlane.f32.xlu0 %v491
      %v493 = vpop.xlane.xlu0 %492
      %v494 = vsel %vm490, %v475, 0.0
      %495 = vadd.xlane.f32.xlu0 %v494
      %v496 = vpop.xlane.xlu0 %495
      %v497 = vsel %vm490, %v476, 0.0
      %498 = vadd.xlane.f32.xlu0 %v497
      %v499 = vpop.xlane.xlu0 %498
      %v500 = vsel %vm490, %v477, 0.0
      %501 = vadd.xlane.f32.xlu0 %v500
      %v502 = vpop.xlane.xlu0 %501
      %v503 = vsel %vm490, %v478, 0.0
      %504 = vadd.xlane.f32.xlu0 %v503
      %v505 = vpop.xlane.xlu0 %504
      %v506 = vsel %vm490, %v479, 0.0
      %507 = vadd.xlane.f32.xlu0 %v506
      %v508 = vpop.xlane.xlu0 %507
      %v509 = vsel %vm490, %v480, 0.0
      %510 = vadd.xlane.f32.xlu0 %v509
      %v511 = vpop.xlane.xlu0 %510
      %v512 = vsel %vm490, %v481, 0.0
      %513 = vadd.xlane.f32.xlu0 %v512
      %v514 = vpop.xlane.xlu0 %513
      %v515 = vsel %vm490, %v482, 0.0
      %516 = vadd.xlane.f32.xlu0 %v515
      %v517 = vpop.xlane.xlu0 %516
      %v518 = vsel %vm490, %v483, 0.0
      %519 = vadd.xlane.f32.xlu0 %v518
      %v520 = vpop.xlane.xlu0 %519
      %v521 = vsel %vm490, %v484, 0.0
      %522 = vadd.xlane.f32.xlu0 %v521
      %v523 = vpop.xlane.xlu0 %522
      %v524 = vsel %vm490, %v485, 0.0
      %525 = vadd.xlane.f32.xlu0 %v524
      %v526 = vpop.xlane.xlu0 %525
      %v527 = vsel %vm490, %v486, 0.0
      %528 = vadd.xlane.f32.xlu0 %v527
      %v529 = vpop.xlane.xlu0 %528
      %v530 = vsel %vm490, %v487, 0.0
      %531 = vadd.xlane.f32.xlu0 %v530
      %v532 = vpop.xlane.xlu0 %531
      %v533 = vsel %vm490, %v488, 0.0
      %534 = vadd.xlane.f32.xlu0 %v533
      %v535 = vpop.xlane.xlu0 %534
      %v536 = vsel %vm490, %v489, 0.0
      %537 = vadd.xlane.f32.xlu0 %v536
      %v538 = vpop.xlane.xlu0 %537
      %s539 = sld [smem:[#allocation2]]
      %v540 = vstv %s539
      %v541 = vadd.f32 %v493, %v540
      %v542 = vadd.f32 %v496, %v540
      %v543 = vadd.f32 %v499, %v540
      %v544 = vadd.f32 %v502, %v540
      %v545 = vadd.f32 %v505, %v540
      %v546 = vadd.f32 %v508, %v540
      %v547 = vadd.f32 %v511, %v540
      %v548 = vadd.f32 %v514, %v540
      %v549 = vadd.f32 %v517, %v540
      %v550 = vadd.f32 %v520, %v540
      %v551 = vadd.f32 %v523, %v540
      %v552 = vadd.f32 %v526, %v540
      %v553 = vadd.f32 %v529, %v540
      %v554 = vadd.f32 %v532, %v540
      %v555 = vadd.f32 %v535, %v540
      %v556 = vadd.f32 %v538, %v540
      %vm557 = vcmask 7168
      %558 = vst.msk [vmem:[%s227] sm:$0xff] %vm557, %v541
      %559 = vst.msk [vmem:[%s227 + $0x8] sm:$0xff] %vm557, %v542
      %560 = vst.msk [vmem:[%s227 + $0x10] sm:$0xff] %vm557, %v543
      %561 = vst.msk [vmem:[%s227 + $0x18] sm:$0xff] %vm557, %v544
      %562 = vst.msk [vmem:[%s227 + $0x20] sm:$0xff] %vm557, %v545
      %563 = vst.msk [vmem:[%s227 + $0x28] sm:$0xff] %vm557, %v546
      %564 = vst.msk [vmem:[%s227 + $0x30] sm:$0xff] %vm557, %v547
      %565 = vst.msk [vmem:[%s227 + $0x38] sm:$0xff] %vm557, %v548
      %566 = vst.msk [vmem:[%s227 + $0x40] sm:$0xff] %vm557, %v549
      %567 = vst.msk [vmem:[%s227 + $0x48] sm:$0xff] %vm557, %v550
      %568 = vst.msk [vmem:[%s227 + $0x50] sm:$0xff] %vm557, %v551
      %569 = vst.msk [vmem:[%s227 + $0x58] sm:$0xff] %vm557, %v552
      %570 = vst.msk [vmem:[%s227 + $0x60] sm:$0xff] %vm557, %v553
      %571 = vst.msk [vmem:[%s227 + $0x68] sm:$0xff] %vm557, %v554
      %572 = vst.msk [vmem:[%s227 + $0x70] sm:$0xff] %vm557, %v555
      %573 = vst.msk [vmem:[%s227 + $0x78] sm:$0xff] %vm557, %v556
      %s574 = smul.u32 16, %s17
      %p575 = scmp.lt.s32.totalorder %s574, 31
      %s576 = scalar_select %p575, %s574, 31
      %s577 = smul.addr %s576, 8
      %s578 = scalar_lea.vmem %s5, %s577
      // Predicated region
      $region41: #{tpu_custom_call.1} parent=39 // pred_check
        %p579 = pneg %p145
      $region42: #{tpu_custom_call.1} parent=39 // pred_check_branch
        %581 = sbr.rel (%p579) target = $region44
      $region43: #{tpu_custom_call.1} parent=39 // pred_region
        %s582 = smul.u32 16, %s17
      $region44: #{tpu_custom_call.1} parent=39 // pred_fallthru
        _
    $region40: #{tpu_custom_call.1} parent=5 // pred_fallthru
      _
    %p583 = scmp.le.s32.totalorder 2, %s12
    // Predicated region
    $region45: #{tpu_custom_call.1} parent=5 // pred_check
      %p584 = pneg %p583
    $region46: #{tpu_custom_call.1} parent=5 // pred_check_branch
      %586 = sbr.rel (%p584) target = $region48
    $region47: #{tpu_custom_call.1} parent=5 // pred_region
      %s587 = ssub.s32 %s12, 2
      // Predicated region
      $region49: #{tpu_custom_call.1} parent=47 // pred_check
        %p588 = pneg %p151
      $region50: #{tpu_custom_call.1} parent=47 // pred_check_branch
        %590 = sbr.rel (%p588) target = $region52
      $region51: #{tpu_custom_call.1} parent=47 // pred_region
        %s591 = smul.u32 16, %s18
        %p592 = scmp.lt.s32.totalorder %s591, 31
        %s593 = scalar_select %p592, %s591, 31
        %s594 = smul.addr %s593, 8
        %s595 = scalar_lea.vmem %s5, %s594
      $region52: #{tpu_custom_call.1} parent=47 // pred_fallthru
        _
    $region48: #{tpu_custom_call.1} parent=5 // pred_fallthru
      _
  $region6: #{tpu_custom_call.1} parent=0 // loop_footer
    %s16 = sadd.s32 1, %s12
  $region7: #{tpu_custom_call.1} parent=0 // loop_footer_branch
    %11 = sbr.rel target = $region3
  $region8: #{tpu_custom_call.1} parent=0 // loop_exit
    _

</llo_original>
